<compile_context>
chip_gen: v5e
topology: v5e:2x2
jax: 0.10.0
libtpu: 0.0.40
codegen_flags: <defaults>
</compile_context>

<pallas_src>
import functools

import jax
import jax.numpy as jnp
from jax.experimental import pallas as pl
from jax.experimental.pallas import tpu as pltpu


# ----------------------------------------------------------------------------
# Fused Pallas kernel: all GCN layers in one call
#   grid = (num_layers L, num_row_tiles RT)   -- both sequential ("arbitrary")
#   per (layer l, row tile rt):
#       y        = (A_rows @ H_l) * scale[l] + shift[l]
#       o_tile   = y                                   (only layer L-1 survives)
#       H_{l+1}[rows] = ReLU(y) @ W[l+1]               (skipped on last layer)
# ----------------------------------------------------------------------------
def fused_gcn_kernel(a_ref, h0_ref, wn_ref, scale_ref, shift_ref, o_ref,
                     xw_ref, *, a_resident):
    l = pl.program_id(0)                 # layer index (outer, sequential)
    rt = pl.program_id(1)                # row-tile index (inner)
    num_layers = pl.num_programs(0)
    tm = o_ref.shape[0]                  # row-tile size

    # Seed ping-pong slot 0 once with the host-precomputed H0 = X @ W[0].
    @pl.when(jnp.logical_and(l == 0, rt == 0))
    def _():
        xw_ref[0] = h0_ref[...]

    off = pl.multiple_of(rt * tm, tm)
    if a_resident:
        # A_hat fully VMEM-resident: slice the row tile in-kernel.
        a_rows = a_ref[pl.ds(off, tm), :]
    else:
        # Streamed (tm, n_pad) row tile.
        a_rows = a_ref[...]

    # Propagation + folded (conv bias + BN) affine for layer l (f32 acc/VPU).
    y = jnp.dot(a_rows, xw_ref[l % 2], preferred_element_type=jnp.float32)
    y = y * scale_ref[0] + shift_ref[0]

    # Always write the output tile: same HBM writeback cost (block index
    # changes every inner step anyway) but the interim data is defined; the
    # last layer's write is the one that lands last in HBM.
    o_ref[...] = y

    # Fused epilogue: next layer's H for these rows (never consumed for l=L-1).
    @pl.when(l < num_layers - 1)
    def _():
        h_next = jnp.maximum(y, 0.0).astype(jnp.bfloat16)
        xw_ref[(l + 1) % 2, pl.ds(off, tm), :] = jnp.dot(
            h_next, wn_ref[0], preferred_element_type=jnp.float32
        ).astype(jnp.bfloat16)


# ----------------------------------------------------------------------------
# Host-side planning / glue
# ----------------------------------------------------------------------------
def _round_up(a, b):
    return (a + b - 1) // b * b


def _vmem_budget_bytes():
    # Per-generation VMEM capacity (v7x: 64 MiB, v5e/v6e: 128 MiB); keep ~15%
    # headroom for compiler-internal scratch.
    cap = 64 * 1024 * 1024
    try:
        cap = int(pltpu.get_tpu_info().vmem_capacity_bytes)
    except Exception:
        pass
    return max(int(cap * 0.85), 32 * 1024 * 1024)


def _plan_tiles(n, c_pad, budget):
    """Pick (n_pad, tm, a_resident) fitting the VMEM budget.

    n_pad is padded up to a multiple of tm (divisibility-free); A_hat residency
    is preferred (removes the per-layer A restream); double-buffering of every
    pipelined input is counted conservatively.
    """
    n_pad0 = _round_up(max(n, 1), 128)

    def fixed_bytes(n_pad, tm):
        return (2 * n_pad * c_pad * 2        # resident H0 input (x2 buffers)
                + 2 * n_pad * c_pad * 2      # bf16 H ping-pong scratch
                + 2 * c_pad * c_pad * 2      # W[l+1] block (x2 buffers)
                + 2 * 2 * c_pad * 4 * 2      # scale/shift blocks (x2 buffers)
                + 2 * tm * c_pad * 4)        # output tile (x2 buffers)

    cands = []
    for cand in (1024, 512, 384, 256, 128):
        tm = min(cand, n_pad0)
        n_pad = _round_up(n_pad0, tm)
        if (tm, n_pad) not in cands:
            cands.append((tm, n_pad))

    # Prefer A_hat fully VMEM-resident: least row padding, then largest tile.
    resident = [(tm, n_pad) for tm, n_pad in cands
                if fixed_bytes(n_pad, tm) + 2 * n_pad * n_pad * 2 <= budget]
    if resident:
        tm, n_pad = sorted(resident, key=lambda c: (c[1], -c[0]))[0]
        return n_pad, tm, True

    # Streaming fallback: largest row tile (best DMA efficiency) that fits.
    streaming = [(tm, n_pad) for tm, n_pad in cands
                 if fixed_bytes(n_pad, tm) + 2 * tm * n_pad * 2 <= budget]
    if streaming:
        tm, n_pad = sorted(streaming, key=lambda c: (c[1], -c[0]))[0]
        return n_pad, tm, False

    # Last resort: smallest tile.
    return _round_up(n_pad0, 128), 128, False


def normalized_adjacency(edge_index, num_nodes):
    # PyG GCNConv: add self loops, symmetric normalization
    #   A_hat = D^{-1/2} (A + I) D^{-1/2},  A[dst, src] = 1
    # TODO(synk): duplicate edges accumulate weight > 1; PyG on a coalesced
    # graph counts them once.
    src = edge_index[0]
    dst = edge_index[1]
    adj = jnp.zeros((num_nodes, num_nodes), jnp.float32)
    adj = adj.at[dst, src].add(1.0)
    adj = adj + jnp.eye(num_nodes, dtype=jnp.float32)
    deg = adj.sum(axis=1)
    dinv = jnp.where(deg > 0, 1.0 / jnp.sqrt(deg), 0.0)
    return adj * dinv[:, None] * dinv[None, :]


def gcn_forward(x, edge_index, params, eps=1e-5):
    n, c_in = x.shape
    num_layers = len(params)
    c_out_final = params[-1]["w"].shape[1]

    # Pad channels to 128 lanes (lane-dense stores, full MXU columns).
    c_pad = _round_up(max([c_in] + [p["w"].shape[1] for p in params]), 128)

    vmem_limit = _vmem_budget_bytes()
    n_pad, tm, a_resident = _plan_tiles(n, c_pad, vmem_limit - 2 * 1024 * 1024)
    num_row_tiles = n_pad // tm

    # Dense normalized adjacency (plain-JAX glue; O(N^2) memory), bf16 MXU feed.
    a_hat = normalized_adjacency(edge_index, n)
    a_pad = jnp.zeros((n_pad, n_pad), jnp.float32).at[:n, :n].set(a_hat)
    a_pad = a_pad.astype(jnp.bfloat16)

    # H0 = X @ W[0], computed once with plain XLA (tiny), padded + bf16.
    h0 = x.astype(jnp.float32) @ params[0]["w"].astype(jnp.float32)
    h0_pad = jnp.zeros((n_pad, c_pad), jnp.float32).at[:n, :h0.shape[1]].set(h0)
    h0_pad = h0_pad.astype(jnp.bfloat16)

    # Stack W[l+1] per layer (layer l's epilogue consumes the NEXT weight; the
    # last slot is never read), plus the folded (conv bias + BN) affine.
    wn_all = jnp.zeros((num_layers, c_pad, c_pad), jnp.float32)
    scale_all = jnp.zeros((num_layers, 1, c_pad), jnp.float32)
    shift_all = jnp.zeros((num_layers, 1, c_pad), jnp.float32)
    for li, p in enumerate(params):
        cout_l = p["w"].shape[1]
        if li + 1 < num_layers:
            wn = params[li + 1]["w"]
            wn_all = wn_all.at[li, :wn.shape[0], :wn.shape[1]].set(wn)
        if "gamma" in p:   # layers 1..6: eval-mode BatchNorm1d -> affine
            s = p["gamma"] / jnp.sqrt(p["rvar"] + eps)
            t = p["beta"] - p["rmean"] * s
        else:              # final layer: no BN
            s = jnp.ones((cout_l,), jnp.float32)
            t = jnp.zeros((cout_l,), jnp.float32)
        scale_all = scale_all.at[li, 0, :cout_l].set(s)
        shift_all = shift_all.at[li, 0, :cout_l].set(p["b"] * s + t)
    wn_all = wn_all.astype(jnp.bfloat16)

    if a_resident:
        a_spec = pl.BlockSpec((n_pad, n_pad), lambda l, rt: (0, 0))
    else:
        a_spec = pl.BlockSpec((tm, n_pad), lambda l, rt: (rt, 0))

    kernel = functools.partial(fused_gcn_kernel, a_resident=a_resident)

    out_padded = pl.pallas_call(
        kernel,
        out_shape=jax.ShapeDtypeStruct((n_pad, c_pad), jnp.float32),
        grid_spec=pltpu.PrefetchScalarGridSpec(
            num_scalar_prefetch=0,
            grid=(num_layers, num_row_tiles),
            in_specs=[
                a_spec,                                                    # A_hat
                pl.BlockSpec((n_pad, c_pad), lambda l, rt: (0, 0)),        # H0
                pl.BlockSpec((1, c_pad, c_pad), lambda l, rt: (l, 0, 0)),  # W[l+1]
                pl.BlockSpec((1, 1, c_pad), lambda l, rt: (l, 0, 0)),      # scale[l]
                pl.BlockSpec((1, 1, c_pad), lambda l, rt: (l, 0, 0)),      # shift[l]
            ],
            out_specs=pl.BlockSpec((tm, c_pad), lambda l, rt: (rt, 0)),
            scratch_shapes=[
                pltpu.VMEM((2, n_pad, c_pad), jnp.bfloat16),  # H ping-pong (bf16)
            ],
        ),
        # Layer axis carries a data dependence through the VMEM ping-pong H
        # scratch (and the row axis feeds it), so both must stay "arbitrary".
        compiler_params=pltpu.CompilerParams(
            dimension_semantics=("arbitrary", "arbitrary"),
            vmem_limit_bytes=vmem_limit,
        ),
    )(a_pad, h0_pad, wn_all, scale_all, shift_all)

    return out_padded[:n, :c_out_final]


# ----------------------------------------------------------------------------
# Parameter init (deterministic, mirrors the PyTorch module's shapes)
# ----------------------------------------------------------------------------
def init_params(key, in_channels, hidden_channels, out_channels):
    dims = [(in_channels, hidden_channels)] + \
           [(hidden_channels, hidden_channels)] * 5 + \
           [(hidden_channels, out_channels)]
    params = []
    for idx, (cin, cout) in enumerate(dims):
        key, kw, kg, kb, km, kv = jax.random.split(key, 6)
        limit = jnp.sqrt(6.0 / (cin + cout))  # glorot (GCNConv default)
        w = jax.random.uniform(kw, (cin, cout), jnp.float32, -limit, limit)
        b = jnp.zeros((cout,), jnp.float32)
        p = dict(w=w, b=b)
        if idx < len(dims) - 1:  # bn1..bn6 (eval mode: running stats)
            p["gamma"] = 1.0 + 0.1 * jax.random.normal(kg, (cout,), jnp.float32)
            p["beta"] = 0.1 * jax.random.normal(kb, (cout,), jnp.float32)
            p["rmean"] = 0.1 * jax.random.normal(km, (cout,), jnp.float32)
            p["rvar"] = 1.0 + 0.1 * jax.random.uniform(kv, (cout,), jnp.float32)
        params.append(p)
    return params


if __name__ == "__main__":
    key = jax.random.PRNGKey(0)
    num_nodes = 8
    in_channels, hidden_channels, out_channels = 16, 32, 8
    num_edges = 24

    key, kx, ke = jax.random.split(key, 3)
    x = jax.random.normal(kx, (num_nodes, in_channels), jnp.float32)
    edge_index = jax.random.randint(ke, (2, num_edges), 0, num_nodes,
                                    dtype=jnp.int32)

    params = init_params(key, in_channels, hidden_channels, out_channels)

    out = gcn_forward(x, edge_index, params)
    out = jax.block_until_ready(out)
    assert out.shape == (num_nodes, out_channels)
    assert bool(jnp.all(jnp.isfinite(out)))
    print("KERNEL_OK")
</pallas_src>

<mosaic_0001>
module attributes {stable_mosaic.version = 11 : i64} {
  func.func @fused_gcn_kernel(%arg0: i32, %arg1: i32, %arg2: memref<128x128xbf16, #tpu.memory_space<vmem>>, %arg3: memref<128x128xbf16, #tpu.memory_space<vmem>>, %arg4: memref<1x128x128xbf16, #tpu.memory_space<vmem>>, %arg5: memref<1x1x128xf32, #tpu.memory_space<vmem>>, %arg6: memref<1x1x128xf32, #tpu.memory_space<vmem>>, %arg7: memref<128x128xf32, #tpu.memory_space<vmem>>, %arg8: memref<2x128x128xbf16, #tpu.memory_space<vmem>>) attributes {dimension_semantics = [#tpu.dimension_semantics<arbitrary>, #tpu.dimension_semantics<arbitrary>], iteration_bounds = array<i64: 7, 1>, scalar_prefetch = 0 : i64, scratch_operands = 1 : i64, tpu.core_type = #tpu.core_type<tc>, window_params = [{pipeline_mode = #tpu.pipeline_mode<synchronous>, transform_indices = @transform_0, window_bounds = array<i64: 128, 128>}, {pipeline_mode = #tpu.pipeline_mode<synchronous>, transform_indices = @transform_1, window_bounds = array<i64: 128, 128>}, {transform_indices = @transform_2, window_bounds = array<i64: 1, 128, 128>}, {transform_indices = @transform_3, window_bounds = array<i64: 1, 1, 128>}, {transform_indices = @transform_4, window_bounds = array<i64: 1, 1, 128>}, {transform_indices = @transform_5, window_bounds = array<i64: 128, 128>}]} {
    %c0_i32 = arith.constant 0 : i32
    %0 = arith.cmpi eq, %arg0, %c0_i32 : i32
    %c0_i32_0 = arith.constant 0 : i32
    %1 = arith.cmpi eq, %arg1, %c0_i32_0 : i32
    %2 = arith.andi %0, %1 : i1
    %3 = arith.extui %2 : i1 to i32
    %c0_i32_1 = arith.constant 0 : i32
    %4 = arith.cmpi ne, %3, %c0_i32_1 : i32
    scf.if %4 {
      %c0_17 = arith.constant 0 : index
      %c0_18 = arith.constant 0 : index
      %35 = vector.load %arg3[%c0_17, %c0_18] : memref<128x128xbf16, #tpu.memory_space<vmem>>, vector<128x128xbf16>
      %c0_19 = arith.constant 0 : index
      %c0_20 = arith.constant 0 : index
      %c0_21 = arith.constant 0 : index
      %36 = vector.load %arg8[%c0_19, %c0_20, %c0_21] : memref<2x128x128xbf16, #tpu.memory_space<vmem>>, vector<1x128x128xbf16>
      %37 = vector.shape_cast %36 : vector<1x128x128xbf16> to vector<128x128xbf16>
      %38 = vector.shape_cast %35 : vector<128x128xbf16> to vector<1x128x128xbf16>
      tpu.vector_store %arg8[%c0_19, %c0_20, %c0_21], %38 {strides = array<i32>} : memref<2x128x128xbf16, #tpu.memory_space<vmem>>, vector<1x128x128xbf16>,
    } else {
    }
    %c128_i32 = arith.constant 128 : i32
    %5 = arith.muli %arg1, %c128_i32 : i32
    %6 = tpu.assume_multiple %5, 128 : i32
    %7 = arith.index_cast %6 : i32 to index
    %c0 = arith.constant 0 : index
    %8 = vector.load %arg2[%7, %c0] : memref<128x128xbf16, #tpu.memory_space<vmem>>, vector<128x128xbf16>
    %c2_i32 = arith.constant 2 : i32
    %c0_i32_2 = arith.constant 0 : i32
    %9 = arith.cmpi eq, %c2_i32, %c0_i32_2 : i32
    %c1_i32 = arith.constant 1 : i32
    %10 = arith.select %9, %c1_i32, %c2_i32 : i32
    %11 = arith.remsi %arg0, %10 : i32
    %c0_i32_3 = arith.constant 0 : i32
    %12 = arith.cmpi ne, %11, %c0_i32_3 : i32
    %c0_i32_4 = arith.constant 0 : i32
    %13 = arith.cmpi slt, %11, %c0_i32_4 : i32
    %c0_i32_5 = arith.constant 0 : i32
    %14 = arith.cmpi slt, %10, %c0_i32_5 : i32
    %15 = arith.xori %13, %14 : i1
    %16 = arith.andi %15, %12 : i1
    %17 = arith.addi %11, %10 : i32
    %18 = arith.select %16, %17, %11 : i32
    %19 = arith.index_cast %18 : i32 to index
    %c0_6 = arith.constant 0 : index
    %c0_7 = arith.constant 0 : index
    %20 = vector.load %arg8[%19, %c0_6, %c0_7] : memref<2x128x128xbf16, #tpu.memory_space<vmem>>, vector<1x128x128xbf16>
    %21 = vector.shape_cast %20 : vector<1x128x128xbf16> to vector<128x128xbf16>
    %cst = arith.constant dense<0.000000e+00> : vector<128x128xf32>
    %22 = tpu.matmul %8, %21, %cst {dimension_numbers = #tpu.dot_dimension_numbers<[1], [0], [0], [1], [0, 0, 1, 1], [], []>} : vector<128x128xbf16>, vector<128x128xbf16>, vector<128x128xf32> -> vector<128x128xf32>
    %c0_8 = arith.constant 0 : index
    %c0_9 = arith.constant 0 : index
    %c0_10 = arith.constant 0 : index
    %23 = vector.load %arg5[%c0_8, %c0_9, %c0_10] : memref<1x1x128xf32, #tpu.memory_space<vmem>>, vector<1x1x128xf32>
    %24 = vector.shape_cast %23 : vector<1x1x128xf32> to vector<1x128xf32>
    %25 = vector.broadcast %24 : vector<1x128xf32> to vector<128x128xf32>
    %26 = arith.mulf %22, %25 : vector<128x128xf32>
    %c0_11 = arith.constant 0 : index
    %c0_12 = arith.constant 0 : index
    %c0_13 = arith.constant 0 : index
    %27 = vector.load %arg6[%c0_11, %c0_12, %c0_13] : memref<1x1x128xf32, #tpu.memory_space<vmem>>, vector<1x1x128xf32>
    %28 = vector.shape_cast %27 : vector<1x1x128xf32> to vector<1x128xf32>
    %29 = vector.broadcast %28 : vector<1x128xf32> to vector<128x128xf32>
    %30 = arith.addf %26, %29 : vector<128x128xf32>
    %c0_14 = arith.constant 0 : index
    %c0_15 = arith.constant 0 : index
    %31 = vector.load %arg7[%c0_14, %c0_15] : memref<128x128xf32, #tpu.memory_space<vmem>>, vector<128x128xf32>
    tpu.vector_store %arg7[%c0_14, %c0_15], %30 {strides = array<i32>} : memref<128x128xf32, #tpu.memory_space<vmem>>, vector<128x128xf32>,
    %c6_i32 = arith.constant 6 : i32
    %32 = arith.cmpi slt, %arg0, %c6_i32 : i32
    %33 = arith.extui %32 : i1 to i32
    %c0_i32_16 = arith.constant 0 : i32
    %34 = arith.cmpi ne, %33, %c0_i32_16 : i32
    scf.if %34 {
      %cst_17 = arith.constant 0.000000e+00 : f32
      %35 = vector.broadcast %cst_17 : f32 to vector<128x128xf32>
      %36 = arith.maximumf %30, %35 : vector<128x128xf32>
      %37 = arith.truncf %36 : vector<128x128xf32> to vector<128x128xbf16>
      %c0_18 = arith.constant 0 : index
      %c0_19 = arith.constant 0 : index
      %c0_20 = arith.constant 0 : index
      %38 = vector.load %arg4[%c0_18, %c0_19, %c0_20] : memref<1x128x128xbf16, #tpu.memory_space<vmem>>, vector<1x128x128xbf16>
      %39 = vector.shape_cast %38 : vector<1x128x128xbf16> to vector<128x128xbf16>
      %cst_21 = arith.constant dense<0.000000e+00> : vector<128x128xf32>
      %40 = tpu.matmul %37, %39, %cst_21 {dimension_numbers = #tpu.dot_dimension_numbers<[1], [0], [0], [1], [0, 0, 1, 1], [], []>} : vector<128x128xbf16>, vector<128x128xbf16>, vector<128x128xf32> -> vector<128x128xf32>
      %41 = arith.truncf %40 : vector<128x128xf32> to vector<128x128xbf16>
      %c1_i32_22 = arith.constant 1 : i32
      %42 = arith.addi %arg0, %c1_i32_22 : i32
      %c2_i32_23 = arith.constant 2 : i32
      %c0_i32_24 = arith.constant 0 : i32
      %43 = arith.cmpi eq, %c2_i32_23, %c0_i32_24 : i32
      %c1_i32_25 = arith.constant 1 : i32
      %44 = arith.select %43, %c1_i32_25, %c2_i32_23 : i32
      %45 = arith.remsi %42, %44 : i32
      %c0_i32_26 = arith.constant 0 : i32
      %46 = arith.cmpi ne, %45, %c0_i32_26 : i32
      %c0_i32_27 = arith.constant 0 : i32
      %47 = arith.cmpi slt, %45, %c0_i32_27 : i32
      %c0_i32_28 = arith.constant 0 : i32
      %48 = arith.cmpi slt, %44, %c0_i32_28 : i32
      %49 = arith.xori %47, %48 : i1
      %50 = arith.andi %49, %46 : i1
      %51 = arith.addi %45, %44 : i32
      %52 = arith.select %50, %51, %45 : i32
      %53 = arith.index_cast %52 : i32 to index
      %54 = arith.index_cast %6 : i32 to index
      %c0_29 = arith.constant 0 : index
      %55 = vector.load %arg8[%53, %54, %c0_29] : memref<2x128x128xbf16, #tpu.memory_space<vmem>>, vector<1x128x128xbf16>
      %56 = vector.shape_cast %55 : vector<1x128x128xbf16> to vector<128x128xbf16>
      %57 = vector.shape_cast %41 : vector<128x128xbf16> to vector<1x128x128xbf16>
      tpu.vector_store %arg8[%53, %54, %c0_29], %57 {strides = array<i32>} : memref<2x128x128xbf16, #tpu.memory_space<vmem>>, vector<1x128x128xbf16>,
    } else {
    }
    return
  }
  func.func @transform_0(%arg0: i32, %arg1: i32) -> (i32, i32) {
    %c0_i32 = arith.constant 0 : i32
    %c0_i32_0 = arith.constant 0 : i32
    %c0_i32_1 = arith.constant 0 : i32
    return %c0_i32, %c0_i32_0 : i32, i32
  }
  func.func @transform_1(%arg0: i32, %arg1: i32) -> (i32, i32) {
    %c0_i32 = arith.constant 0 : i32
    %c0_i32_0 = arith.constant 0 : i32
    %c0_i32_1 = arith.constant 0 : i32
    return %c0_i32, %c0_i32_0 : i32, i32
  }
  func.func @transform_2(%arg0: i32, %arg1: i32) -> (i32, i32, i32) {
    %c0_i32 = arith.constant 0 : i32
    %c0_i32_0 = arith.constant 0 : i32
    %c0_i32_1 = arith.constant 0 : i32
    return %arg0, %c0_i32, %c0_i32_0 : i32, i32, i32
  }
  func.func @transform_3(%arg0: i32, %arg1: i32) -> (i32, i32, i32) {
    %c0_i32 = arith.constant 0 : i32
    %c0_i32_0 = arith.constant 0 : i32
    %c0_i32_1 = arith.constant 0 : i32
    return %arg0, %c0_i32, %c0_i32_0 : i32, i32, i32
  }
  func.func @transform_4(%arg0: i32, %arg1: i32) -> (i32, i32, i32) {
    %c0_i32 = arith.constant 0 : i32
    %c0_i32_0 = arith.constant 0 : i32
    %c0_i32_1 = arith.constant 0 : i32
    return %arg0, %c0_i32, %c0_i32_0 : i32, i32, i32
  }
  func.func @transform_5(%arg0: i32, %arg1: i32) -> (i32, i32) {
    %c0_i32 = arith.constant 0 : i32
    %c0_i32_0 = arith.constant 0 : i32
    return %arg1, %c0_i32 : i32, i32
  }
}

</mosaic_0001>

<llo_original>
// kernel: tpu_custom_call.1
$region0: #{tpu_custom_call.1}
  #allocation0 [shape = 'u32[]', space=smem, size = 0x4, offset = 0x4, fixed_abs, tag = 'smem constant byte address 0x4 - core index']
  #allocation1 [shape = 'u32[72,128]{1,0:T(1,128)}', space=vmem, size = 0x9000, scoped, tag = 'internal scratch']
  #allocation2 [shape = 'bf16[2,128,128]{2,1,0:T(8,128)(2,1)}', space=vmem, size = 0x10000, scoped, tag = 'scratch operand']
  %s0 = inlined_call_operand.hbm [shape: bf16[128,128], index: 0, kind: input, shape index: {}]
  %s1 = inlined_call_operand.hbm [shape: bf16[128,128], index: 1, kind: input, shape index: {}]
  %s2 = inlined_call_operand.hbm [shape: bf16[7,128,128], index: 2, kind: input, shape index: {}]
  %s3 = inlined_call_operand.hbm [shape: f32[7,1,128], index: 3, kind: input, shape index: {}]
  %s4 = inlined_call_operand.hbm [shape: f32[7,1,128], index: 4, kind: input, shape index: {}]
  %s5 = inlined_call_operand.hbm [shape: f32[128,128], index: 5, kind: output, shape index: {}]
  %s6 = sld [smem:[#allocation0]]
  $region81: #{tpu_custom_call.1} parent=0
    _
  %s8 = ssub.s32 1, %s6
  %s9 = scalar_select 0, %s8, %s6
  $region1: #{tpu_custom_call.1} parent=0
    #allocation3 [shape = 'u8[32768]{0}', space=vmem, size = 0x8000, scoped, tag = 'input window, operand 0, single buffered']
    #allocation4 [shape = 's32[2]{0}', space=sflag, size = 0x8, scoped, tag = 'scoped memory for tpu_custom_call.1']
    #allocation5 [shape = 's32[2]{0}', space=sflag, size = 0x8, scoped, tag = 'scoped memory for tpu_custom_call.1']
    #allocation6 [shape = 'u8[32768]{0}', space=vmem, size = 0x8000, scoped, tag = 'input window, operand 1, single buffered']
    #allocation7 [shape = 's32[1]{0}', space=sflag, size = 0x4, scoped, tag = 'scoped memory for tpu_custom_call.1']
    #allocation8 [shape = 'u8[65536]{0}', space=vmem, size = 0x10000, scoped, tag = 'input window, operand 2']
    #allocation9 [shape = 'u8[1024]{0}', space=vmem, size = 0x400, scoped, tag = 'input window, operand 3']
    #allocation10 [shape = 'u8[1024]{0}', space=vmem, size = 0x400, scoped, tag = 'input window, operand 4']
    #allocation11 [shape = 'u8[65536]{0}', space=vmem, size = 0x10000, scoped, tag = 'output window, operand 0, single buffered']
    %10 = vsyncpa [#allocation4], 0
    %11 = vsyncpa [#allocation7], 0
    %12 = vsyncpa [#allocation5], 0
    loop: start=0, step=1, limit=9
    $region2: #{tpu_custom_call.1} parent=1 // loop_pre_header
      _
    $region3: #{tpu_custom_call.1} parent=1 // loop_header
      %s14 = sphi 0, %s18
      %p15 = scmp.ge.s32.totalorder %s14, 9
      %s21 = sphi 0, %s33
      %s22 = sphi 0, %s29
      %s23 = sphi 0, %s21
      %s24 = sphi 0, %s22
      %s25 = sphi 0, %s23
      %s26 = sphi 0, %s24
      %s34 = sphi 0, %s34
      %s36 = sphi 0, %s34
      %s37 = sphi 0, %s36
      %s51 = sphi 0, %s37
      %s55 = sphi 0, %s55
      %s57 = sphi 0, %s55
      %s58 = sphi 0, %s57
      %s72 = sphi 0, %s58
      %s78 = sphi 0, %s80
      %s81 = sphi 0, %s78
      %s82 = sphi 0, %s81
      %s98 = sphi 0, %s82
      %s104 = sphi 0, %s106
      %s107 = sphi 0, %s104
      %s108 = sphi 0, %s107
      %s124 = sphi 0, %s108
      %s130 = sphi 0, %s132
      %s133 = sphi 0, %s130
      %s134 = sphi 0, %s133
      %s150 = sphi 0, %s134
      %s156 = sphi 0, %s158
      %s159 = sphi 0, %s156
      %s160 = sphi 0, %s159
      %s176 = sphi 0, %s160
    $region4: #{tpu_custom_call.1} parent=1 // loop_header_branch
      %17 = sbr.rel (%p15) target = $region8
    $region5: #{tpu_custom_call.1} parent=1 // loop_body
      %s19 = ssub.s32 %s14, 1
      %s20 = ssub.s32 %s14, 2
      %s27 = sadd.s32 1, %s22
      %p28 = scmp.ge.s32.totalorder %s27, 1
      %s29 = scalar_select %p28, 0, %s27
      %s30 = sadd.s32 1, %s21
      %s31 = scalar_select %p28, %s30, %s21
      %p32 = scmp.ge.s32.totalorder %s31, 7
      %s33 = scalar_select %p32, 0, %s31
      %s35 = sadd.s32 %s34, 1
      %p38 = scmp.eq.s32.totalorder %s14, 6
      %p39 = scmp.ne.s32.totalorder %s34, %s36
      %p40 = scmp.eq.s32.totalorder %s14, 0
      %p41 = por %p39, %p40
      %p42 = scmp.ne.s32.totalorder %s34, %s36
      %p43 = scmp.eq.s32.totalorder %s19, 6
      %p44 = por %p42, %p43
      %p45 = scmp.ne.s32.totalorder %s36, %s37
      %p46 = scmp.eq.s32.totalorder %s19, 0
      %p47 = por %p45, %p46
      %p48 = scmp.ne.s32.totalorder %s36, %s37
      %p49 = scmp.eq.s32.totalorder %s20, 6
      %p50 = por %p48, %p49
      %p52 = scmp.ne.s32.totalorder %s37, %s51
      %p53 = scmp.eq.s32.totalorder %s20, 0
      %p54 = por %p52, %p53
      %s56 = sadd.s32 %s55, 1
      %p59 = scmp.eq.s32.totalorder %s14, 6
      %p60 = scmp.ne.s32.totalorder %s55, %s57
      %p61 = scmp.eq.s32.totalorder %s14, 0
      %p62 = por %p60, %p61
      %p63 = scmp.ne.s32.totalorder %s55, %s57
      %p64 = scmp.eq.s32.totalorder %s19, 6
      %p65 = por %p63, %p64
      %p66 = scmp.ne.s32.totalorder %s57, %s58
      %p67 = scmp.eq.s32.totalorder %s19, 0
      %p68 = por %p66, %p67
      %p69 = scmp.ne.s32.totalorder %s57, %s58
      %p70 = scmp.eq.s32.totalorder %s20, 6
      %p71 = por %p69, %p70
      %p73 = scmp.ne.s32.totalorder %s58, %s72
      %p74 = scmp.eq.s32.totalorder %s20, 0
      %p75 = por %p73, %p74
      %s76 = ssub.s32 %s21, %s33
      %p77 = scmp.eq.s32.totalorder %s76, 0
      %s79 = sadd.s32 %s78, 1
      %s80 = scalar_select %p77, %s78, %s79
      %p83 = pneg %p77
      %p84 = scmp.eq.s32.totalorder %s14, 6
      %p85 = por %p83, %p84
      %p86 = scmp.ne.s32.totalorder %s78, %s81
      %p87 = scmp.eq.s32.totalorder %s14, 0
      %p88 = por %p86, %p87
      %p89 = scmp.ne.s32.totalorder %s78, %s81
      %p90 = scmp.eq.s32.totalorder %s19, 6
      %p91 = por %p89, %p90
      %p92 = scmp.ne.s32.totalorder %s81, %s82
      %p93 = scmp.eq.s32.totalorder %s19, 0
      %p94 = por %p92, %p93
      %p95 = scmp.ne.s32.totalorder %s81, %s82
      %p96 = scmp.eq.s32.totalorder %s20, 6
      %p97 = por %p95, %p96
      %p99 = scmp.ne.s32.totalorder %s82, %s98
      %p100 = scmp.eq.s32.totalorder %s20, 0
      %p101 = por %p99, %p100
      %s102 = ssub.s32 %s21, %s33
      %p103 = scmp.eq.s32.totalorder %s102, 0
      %s105 = sadd.s32 %s104, 1
      %s106 = scalar_select %p103, %s104, %s105
      %p109 = pneg %p103
      %p110 = scmp.eq.s32.totalorder %s14, 6
      %p111 = por %p109, %p110
      %p112 = scmp.ne.s32.totalorder %s104, %s107
      %p113 = scmp.eq.s32.totalorder %s14, 0
      %p114 = por %p112, %p113
      %p115 = scmp.ne.s32.totalorder %s104, %s107
      %p116 = scmp.eq.s32.totalorder %s19, 6
      %p117 = por %p115, %p116
      %p118 = scmp.ne.s32.totalorder %s107, %s108
      %p119 = scmp.eq.s32.totalorder %s19, 0
      %p120 = por %p118, %p119
      %p121 = scmp.ne.s32.totalorder %s107, %s108
      %p122 = scmp.eq.s32.totalorder %s20, 6
      %p123 = por %p121, %p122
      %p125 = scmp.ne.s32.totalorder %s108, %s124
      %p126 = scmp.eq.s32.totalorder %s20, 0
      %p127 = por %p125, %p126
      %s128 = ssub.s32 %s21, %s33
      %p129 = scmp.eq.s32.totalorder %s128, 0
      %s131 = sadd.s32 %s130, 1
      %s132 = scalar_select %p129, %s130, %s131
      %p135 = pneg %p129
      %p136 = scmp.eq.s32.totalorder %s14, 6
      %p137 = por %p135, %p136
      %p138 = scmp.ne.s32.totalorder %s130, %s133
      %p139 = scmp.eq.s32.totalorder %s14, 0
      %p140 = por %p138, %p139
      %p141 = scmp.ne.s32.totalorder %s130, %s133
      %p142 = scmp.eq.s32.totalorder %s19, 6
      %p143 = por %p141, %p142
      %p144 = scmp.ne.s32.totalorder %s133, %s134
      %p145 = scmp.eq.s32.totalorder %s19, 0
      %p146 = por %p144, %p145
      %p147 = scmp.ne.s32.totalorder %s133, %s134
      %p148 = scmp.eq.s32.totalorder %s20, 6
      %p149 = por %p147, %p148
      %p151 = scmp.ne.s32.totalorder %s134, %s150
      %p152 = scmp.eq.s32.totalorder %s20, 0
      %p153 = por %p151, %p152
      %s154 = ssub.s32 %s22, %s29
      %p155 = scmp.eq.s32.totalorder %s154, 0
      %s157 = sadd.s32 %s156, 1
      %s158 = scalar_select %p155, %s156, %s157
      %p161 = pneg %p155
      %p162 = scmp.eq.s32.totalorder %s14, 6
      %p163 = por %p161, %p162
      %p164 = scmp.ne.s32.totalorder %s156, %s159
      %p165 = scmp.eq.s32.totalorder %s14, 0
      %p166 = por %p164, %p165
      %p167 = scmp.ne.s32.totalorder %s156, %s159
      %p168 = scmp.eq.s32.totalorder %s19, 6
      %p169 = por %p167, %p168
      %p170 = scmp.ne.s32.totalorder %s159, %s160
      %p171 = scmp.eq.s32.totalorder %s19, 0
      %p172 = por %p170, %p171
      %p173 = scmp.ne.s32.totalorder %s159, %s160
      %p174 = scmp.eq.s32.totalorder %s20, 6
      %p175 = por %p173, %p174
      %p177 = scmp.ne.s32.totalorder %s160, %s176
      %p178 = scmp.eq.s32.totalorder %s20, 0
      %p179 = por %p177, %p178
      %p180 = scmp.le.s32.totalorder 1, %s14
      %p181 = scmp.lt.s32.totalorder %s14, 8
      %p182 = pnand %p180, %p181
      %p183 = pneg %p182
      // Predicated region
      $region9: #{tpu_custom_call.1} parent=5 // pred_check
        _
      $region10: #{tpu_custom_call.1} parent=5 // pred_check_branch
        %185 = sbr.rel (%p182) target = $region12
      $region11: #{tpu_custom_call.1} parent=5 // pred_region
        %s186 = ssub.s32 %s14, 1
        // Predicated region
        $region13: #{tpu_custom_call.1} parent=11 // pred_check
          %p187 = pneg %p47
        $region14: #{tpu_custom_call.1} parent=11 // pred_check_branch
          %189 = sbr.rel (%p187) target = $region16
        $region15: #{tpu_custom_call.1} parent=11 // pred_region
          %191 = vsyncadd [#allocation4], 0
          %s192 = sshll.u32 %s0, 4
          %s193 = int_to_ptr.hbm [resolvable:$true] %s192
          %s194 = sshll.u32 [#allocation3], 4
          %s195 = int_to_ptr.vmem [resolvable:$true] %s194
          %200 = dma.hbm_to_vmem [thread:$0]  %s193, 1024, %s195, [#allocation4], 64, 64, 4
        $region16: #{tpu_custom_call.1} parent=11 // pred_fallthru
          _
        // Predicated region
        $region17: #{tpu_custom_call.1} parent=11 // pred_check
          %p201 = pneg %p68
        $region18: #{tpu_custom_call.1} parent=11 // pred_check_branch
          %203 = sbr.rel (%p201) target = $region20
        $region19: #{tpu_custom_call.1} parent=11 // pred_region
          %205 = vsyncadd [#allocation7], 0
          %s206 = sshll.u32 %s1, 4
          %s207 = int_to_ptr.hbm [resolvable:$true] %s206
          %s208 = sshll.u32 [#allocation6], 4
          %s209 = int_to_ptr.vmem [resolvable:$true] %s208
          %214 = dma.hbm_to_vmem [thread:$0]  %s207, 1024, %s209, [#allocation7], 64, 64, 4
        $region20: #{tpu_custom_call.1} parent=11 // pred_fallthru
          _
      $region12: #{tpu_custom_call.1} parent=5 // pred_fallthru
        _
      %p215 = scmp.lt.s32.totalorder %s14, 7
      // Predicated region
      $region21: #{tpu_custom_call.1} parent=5 // pred_check
        %p216 = pneg %p215
      $region22: #{tpu_custom_call.1} parent=5 // pred_check_branch
        %218 = sbr.rel (%p216) target = $region24
      $region23: #{tpu_custom_call.1} parent=5 // pred_region
        // Predicated region
        $region25: #{tpu_custom_call.1} parent=23 // pred_check
          %p219 = pneg %p88
        $region26: #{tpu_custom_call.1} parent=23 // pred_check_branch
          %221 = sbr.rel (%p219) target = $region28
        $region27: #{tpu_custom_call.1} parent=23 // pred_region
          %s222 = sand.u32 %s14, 1
          %s223 = scalar_lea.sflag [#allocation4], %s222
          %s224 = sand.u32 %s78, 1
          %s225 = smul.addr %s224, 64
          %s226 = scalar_lea.vmem [#allocation8], %s225
          %228 = vsyncadd %s223, 0
          %s229 = smul.addr %s21, 16
          %s230 = smul.addr %s229, 4
          %s231 = scalar_lea.hbm %s2, %s230
          %s232 = sshll.u32 %s231, 4
          %s233 = int_to_ptr.hbm [resolvable:$true] %s232
          %s234 = sshll.u32 %s226, 4
          %s235 = int_to_ptr.vmem [resolvable:$true] %s234
          %240 = dma.hbm_to_vmem [thread:$0]  %s233, 1024, %s235, %s223, 64, 64, 4
        $region28: #{tpu_custom_call.1} parent=23 // pred_fallthru
          _
        // Predicated region
        $region29: #{tpu_custom_call.1} parent=23 // pred_check
          %p241 = pneg %p114
        $region30: #{tpu_custom_call.1} parent=23 // pred_check_branch
          %243 = sbr.rel (%p241) target = $region32
        $region31: #{tpu_custom_call.1} parent=23 // pred_region
          %s244 = sand.u32 %s14, 1
          %s245 = scalar_lea.sflag [#allocation4], %s244
          %s246 = sand.u32 %s104, 1
          %s247 = scalar_lea.vmem [#allocation9], %s246
          %249 = vsyncadd %s245, 0
          %s250 = scalar_lea.hbm %s3, %s21
          %s252 = sshll.u32 %s250, 4
          %s253 = int_to_ptr.hbm [resolvable:$true] %s252
          %s254 = sshll.u32 %s247, 4
          %s255 = int_to_ptr.vmem [resolvable:$true] %s254
          %257 = dma.hbm_to_vmem [thread:$0]  %s253, 16, %s255, %s245
        $region32: #{tpu_custom_call.1} parent=23 // pred_fallthru
          _
        // Predicated region
        $region33: #{tpu_custom_call.1} parent=23 // pred_check
          %p258 = pneg %p140
        $region34: #{tpu_custom_call.1} parent=23 // pred_check_branch
          %260 = sbr.rel (%p258) target = $region36
        $region35: #{tpu_custom_call.1} parent=23 // pred_region
          %s261 = sand.u32 %s14, 1
          %s262 = scalar_lea.sflag [#allocation4], %s261
          %s263 = sand.u32 %s130, 1
          %s264 = scalar_lea.vmem [#allocation10], %s263
          %266 = vsyncadd %s262, 0
          %s267 = scalar_lea.hbm %s4, %s21
          %s269 = sshll.u32 %s267, 4
          %s270 = int_to_ptr.hbm [resolvable:$true] %s269
          %s271 = sshll.u32 %s264, 4
          %s272 = int_to_ptr.vmem [resolvable:$true] %s271
          %274 = dma.hbm_to_vmem [thread:$0]  %s270, 16, %s272, %s262
        $region36: #{tpu_custom_call.1} parent=23 // pred_fallthru
          _
      $region24: #{tpu_custom_call.1} parent=5 // pred_fallthru
        _
      %p275 = scmp.le.s32.totalorder 1, %s14
      %p276 = scmp.lt.s32.totalorder %s14, 8
      %p277 = pnand %p275, %p276
      %p278 = pneg %p277
      // Predicated region
      $region37: #{tpu_custom_call.1} parent=5 // pred_check
        _
      $region38: #{tpu_custom_call.1} parent=5 // pred_check_branch
        %280 = sbr.rel (%p277) target = $region40
      $region39: #{tpu_custom_call.1} parent=5 // pred_region
        %s281 = ssub.s32 %s14, 1
        // Predicated region
        $region41: #{tpu_custom_call.1} parent=39 // pred_check
          %p282 = pneg %p47
        $region42: #{tpu_custom_call.1} parent=39 // pred_check_branch
          %284 = sbr.rel (%p282) target = $region44
        $region43: #{tpu_custom_call.1} parent=39 // pred_region
          %286 = dma.done [#allocation4], 1024
        $region44: #{tpu_custom_call.1} parent=39 // pred_fallthru
          _
        // Predicated region
        $region45: #{tpu_custom_call.1} parent=39 // pred_check
          %p287 = pneg %p68
        $region46: #{tpu_custom_call.1} parent=39 // pred_check_branch
          %289 = sbr.rel (%p287) target = $region48
        $region47: #{tpu_custom_call.1} parent=39 // pred_region
          %291 = dma.done [#allocation7], 1024
        $region48: #{tpu_custom_call.1} parent=39 // pred_fallthru
          _
        %s292 = sand.u32 %s19, 1
        %s293 = scalar_lea.sflag [#allocation4], %s292
        %s294 = sand.u32 %s81, 1
        %s295 = smul.addr %s294, 64
        %s296 = scalar_lea.vmem [#allocation8], %s295
        // Predicated region
        $region49: #{tpu_custom_call.1} parent=39 // pred_check
          %p297 = pneg %p94
        $region50: #{tpu_custom_call.1} parent=39 // pred_check_branch
          %299 = sbr.rel (%p297) target = $region52
        $region51: #{tpu_custom_call.1} parent=39 // pred_region
          %301 = dma.done %s293, 1024
        $region52: #{tpu_custom_call.1} parent=39 // pred_fallthru
          _
        %s302 = sand.u32 %s19, 1
        %s303 = scalar_lea.sflag [#allocation4], %s302
        %s304 = sand.u32 %s107, 1
        %s305 = scalar_lea.vmem [#allocation9], %s304
        // Predicated region
        $region53: #{tpu_custom_call.1} parent=39 // pred_check
          %p306 = pneg %p120
        $region54: #{tpu_custom_call.1} parent=39 // pred_check_branch
          %308 = sbr.rel (%p306) target = $region56
        $region55: #{tpu_custom_call.1} parent=39 // pred_region
          %310 = dma.done %s303, 16
        $region56: #{tpu_custom_call.1} parent=39 // pred_fallthru
          _
        %s311 = sand.u32 %s19, 1
        %s312 = scalar_lea.sflag [#allocation4], %s311
        %s313 = sand.u32 %s133, 1
        %s314 = scalar_lea.vmem [#allocation10], %s313
        // Predicated region
        $region57: #{tpu_custom_call.1} parent=39 // pred_check
          %p315 = pneg %p146
        $region58: #{tpu_custom_call.1} parent=39 // pred_check_branch
          %317 = sbr.rel (%p315) target = $region60
        $region59: #{tpu_custom_call.1} parent=39 // pred_region
          %319 = dma.done %s312, 16
        $region60: #{tpu_custom_call.1} parent=39 // pred_fallthru
          _
        %p320 = pneg %p47
        %p321 = pneg %p44
        %p322 = pneg %p68
        %p323 = pneg %p65
        %s324 = sand.u32 %s19, 1
        %s325 = scalar_lea.sflag [#allocation4], %s324
        %s326 = sand.u32 %s81, 1
        %s327 = smul.addr %s326, 64
        %s328 = scalar_lea.vmem [#allocation8], %s327
        %p329 = pneg %p94
        %p330 = pneg %p91
        %s331 = sand.u32 %s19, 1
        %s332 = scalar_lea.sflag [#allocation4], %s331
        %s333 = sand.u32 %s107, 1
        %s334 = scalar_lea.vmem [#allocation9], %s333
        %p335 = pneg %p120
        %p336 = pneg %p117
        %s337 = sand.u32 %s19, 1
        %s338 = scalar_lea.sflag [#allocation4], %s337
        %s339 = sand.u32 %s133, 1
        %s340 = scalar_lea.vmem [#allocation10], %s339
        %p341 = pneg %p146
        %p342 = pneg %p143
        %p343 = pneg %p172
        %p344 = pneg %p169
        %s345 = smul.u32 16, %s24
        %p346 = scmp.eq.s32.totalorder %s23, 0
        %p347 = scmp.eq.s32.totalorder %s24, 0
        %p348 = pnand %p346, %p347
        %p349 = pneg %p348
        // Predicated region
        $region61: #{tpu_custom_call.1} parent=39 // pred_check
          _
        $region62: #{tpu_custom_call.1} parent=39 // pred_check_branch
          %351 = sbr.rel (%p348) target = $region64
        $region63: #{tpu_custom_call.1} parent=39 // pred_region
          %v352 = vld [vmem:[#allocation6] sm:$0xf]
          %v353 = vld [vmem:[#allocation6 + $0x4] sm:$0xf]
          %v354 = vld [vmem:[#allocation6 + $0x8] sm:$0xf]
          %v355 = vld [vmem:[#allocation6 + $0xc] sm:$0xf]
          %v356 = vld [vmem:[#allocation6 + $0x10] sm:$0xf]
          %v357 = vld [vmem:[#allocation6 + $0x14] sm:$0xf]
          %v358 = vld [vmem:[#allocation6 + $0x18] sm:$0xf]
          %v359 = vld [vmem:[#allocation6 + $0x1c] sm:$0xf]
          %v360 = vld [vmem:[#allocation6 + $0x20] sm:$0xf]
          %v361 = vld [vmem:[#allocation6 + $0x24] sm:$0xf]
          %v362 = vld [vmem:[#allocation6 + $0x28] sm:$0xf]
          %v363 = vld [vmem:[#allocation6 + $0x2c] sm:$0xf]
          %v364 = vld [vmem:[#allocation6 + $0x30] sm:$0xf]
          %v365 = vld [vmem:[#allocation6 + $0x34] sm:$0xf]
          %v366 = vld [vmem:[#allocation6 + $0x38] sm:$0xf]
          %v367 = vld [vmem:[#allocation6 + $0x3c] sm:$0xf]
          %368 = vst [vmem:[#allocation2] sm:$0xf] %v352
          %369 = vst [vmem:[#allocation2 + $0x4] sm:$0xf] %v353
          %370 = vst [vmem:[#allocation2 + $0x8] sm:$0xf] %v354
          %371 = vst [vmem:[#allocation2 + $0xc] sm:$0xf] %v355
          %372 = vst [vmem:[#allocation2 + $0x10] sm:$0xf] %v356
          %373 = vst [vmem:[#allocation2 + $0x14] sm:$0xf] %v357
          %374 = vst [vmem:[#allocation2 + $0x18] sm:$0xf] %v358
          %375 = vst [vmem:[#allocation2 + $0x1c] sm:$0xf] %v359
          %376 = vst [vmem:[#allocation2 + $0x20] sm:$0xf] %v360
          %377 = vst [vmem:[#allocation2 + $0x24] sm:$0xf] %v361
          %378 = vst [vmem:[#allocation2 + $0x28] sm:$0xf] %v362
          %379 = vst [vmem:[#allocation2 + $0x2c] sm:$0xf] %v363
          %380 = vst [vmem:[#allocation2 + $0x30] sm:$0xf] %v364
          %381 = vst [vmem:[#allocation2 + $0x34] sm:$0xf] %v365
          %382 = vst [vmem:[#allocation2 + $0x38] sm:$0xf] %v366
          %383 = vst [vmem:[#allocation2 + $0x3c] sm:$0xf] %v367
        $region64: #{tpu_custom_call.1} parent=39 // pred_fallthru
          _
        %s384 = smul.u32 %s24, 128
        %s385 = sshra.s32 %s384, 3
        %s386 = sand.u32 %s384, 7
        %s387 = smul.addr %s385, 4
        %s388 = scalar_lea.vmem [#allocation3], %s387
        %v389 = vld [vmem:[%s388] sm:$0xf]
        %v390 = vld [vmem:[%s388 + $0x4] sm:$0xf]
        %v391 = vld [vmem:[%s388 + $0x8] sm:$0xf]
        %v392 = vld [vmem:[%s388 + $0xc] sm:$0xf]
        %v393 = vld [vmem:[%s388 + $0x10] sm:$0xf]
        %v394 = vld [vmem:[%s388 + $0x14] sm:$0xf]
        %v395 = vld [vmem:[%s388 + $0x18] sm:$0xf]
        %v396 = vld [vmem:[%s388 + $0x1c] sm:$0xf]
        %v397 = vld [vmem:[%s388 + $0x20] sm:$0xf]
        %v398 = vld [vmem:[%s388 + $0x24] sm:$0xf]
        %v399 = vld [vmem:[%s388 + $0x28] sm:$0xf]
        %v400 = vld [vmem:[%s388 + $0x2c] sm:$0xf]
        %v401 = vld [vmem:[%s388 + $0x30] sm:$0xf]
        %v402 = vld [vmem:[%s388 + $0x34] sm:$0xf]
        %v403 = vld [vmem:[%s388 + $0x38] sm:$0xf]
        %v404 = vld [vmem:[%s388 + $0x3c] sm:$0xf]
        %p405 = scmp.lt.s32.totalorder %s23, 0
        %s406 = ssub.s32 0, %s23
        %s407 = scalar_select %p405, %s406, %s23
        %s408 = sand.u32 %s407, 1
        %s409 = ssub.s32 0, %s408
        %s410 = scalar_select %p405, %s409, %s408
        %p411 = scmp.ne.s32.totalorder %s410, 0
        %p412 = scmp.lt.s32.totalorder %s410, 0
        %p413 = pnand %p412, %p411
        %p414 = pneg %p413
        %s415 = sadd.s32 %s410, 2
        %s416 = scalar_select %p414, %s415, %s410
        %s417 = smul.u32 %s416, 16
        %s418 = smul.addr %s417, 4
        %s419 = scalar_lea.vmem [#allocation2], %s418
        %v420 = vld [vmem:[%s419] sm:$0xf]
        %v421 = vld [vmem:[%s419 + $0x4] sm:$0xf]
        %v422 = vld [vmem:[%s419 + $0x8] sm:$0xf]
        %v423 = vld [vmem:[%s419 + $0xc] sm:$0xf]
        %v424 = vld [vmem:[%s419 + $0x10] sm:$0xf]
        %v425 = vld [vmem:[%s419 + $0x14] sm:$0xf]
        %v426 = vld [vmem:[%s419 + $0x18] sm:$0xf]
        %v427 = vld [vmem:[%s419 + $0x1c] sm:$0xf]
        %v428 = vld [vmem:[%s419 + $0x20] sm:$0xf]
        %v429 = vld [vmem:[%s419 + $0x24] sm:$0xf]
        %v430 = vld [vmem:[%s419 + $0x28] sm:$0xf]
        %v431 = vld [vmem:[%s419 + $0x2c] sm:$0xf]
        %v432 = vld [vmem:[%s419 + $0x30] sm:$0xf]
        %v433 = vld [vmem:[%s419 + $0x34] sm:$0xf]
        %v434 = vld [vmem:[%s419 + $0x38] sm:$0xf]
        %v435 = vld [vmem:[%s419 + $0x3c] sm:$0xf]
        %v452 = vunpack.c.l.b16 %v389
        %v453 = vunpack.c.l.b16 %v390
        %v454 = vunpack.c.l.b16 %v391
        %v455 = vunpack.c.l.b16 %v392
        %v456 = vunpack.c.l.b16 %v393
        %v457 = vunpack.c.l.b16 %v394
        %v458 = vunpack.c.l.b16 %v395
        %v459 = vunpack.c.l.b16 %v396
        %v460 = vunpack.c.l.b16 %v397
        %v461 = vunpack.c.l.b16 %v398
        %v462 = vunpack.c.l.b16 %v399
        %v463 = vunpack.c.l.b16 %v400
        %v464 = vunpack.c.l.b16 %v401
        %v465 = vunpack.c.l.b16 %v402
        %v466 = vunpack.c.l.b16 %v403
        %v467 = vunpack.c.l.b16 %v404
        %v468 = vpack.c.b16 %v453, %v452
        %v469 = vpack.c.b16 %v455, %v454
        %v470 = vpack.c.b16 %v457, %v456
        %v471 = vpack.c.b16 %v459, %v458
        %v472 = vpack.c.b16 %v461, %v460
        %v473 = vpack.c.b16 %v463, %v462
        %v474 = vpack.c.b16 %v465, %v464
        %v475 = vpack.c.b16 %v467, %v466
        %v500 = vunpack.c.l.b16 %v420
        %v501 = vunpack.c.l.b16 %v421
        %v502 = vunpack.c.l.b16 %v422
        %v503 = vunpack.c.l.b16 %v423
        %v504 = vunpack.c.l.b16 %v424
        %v505 = vunpack.c.l.b16 %v425
        %v506 = vunpack.c.l.b16 %v426
        %v507 = vunpack.c.l.b16 %v427
        %v508 = vunpack.c.l.b16 %v428
        %v509 = vunpack.c.l.b16 %v429
        %v510 = vunpack.c.l.b16 %v430
        %v511 = vunpack.c.l.b16 %v431
        %v512 = vunpack.c.l.b16 %v432
        %v513 = vunpack.c.l.b16 %v433
        %v514 = vunpack.c.l.b16 %v434
        %v515 = vunpack.c.l.b16 %v435
        %v516 = vpack.c.b16 %v501, %v500
        %v517 = vpack.c.b16 %v503, %v502
        %v518 = vpack.c.b16 %v505, %v504
        %v519 = vpack.c.b16 %v507, %v506
        %v520 = vpack.c.b16 %v509, %v508
        %v521 = vpack.c.b16 %v511, %v510
        %v522 = vpack.c.b16 %v513, %v512
        %v523 = vpack.c.b16 %v515, %v514
        %532 = vmatpush.bf16.msra.mxu0 %v523
        %533 = vmatpush.bf16.msra.mxu0 %v522
        %534 = vmatpush.bf16.msra.mxu0 %v521
        %535 = vmatpush.bf16.msra.mxu0 %v520
        %536 = vmatpush.bf16.msra.mxu0 %v519
        %537 = vmatpush.bf16.msra.mxu0 %v518
        %538 = vmatpush.bf16.msra.mxu0 %v517
        %539 = vmatpush.bf16.msra.mxu0 %v516
        %540 = vmatmul.bf16.gmra.mxu0 %v468
        %v541 = vpop.f32.mrf.mxu0
        %v542 = vadd.f32 0.0, %v541
        %v543 = vpop.f32.mrf.mxu0
        %v544 = vadd.f32 0.0, %v543
        %545 = vmatmul.bf16.gmra.mxu0 %v469
        %v546 = vpop.f32.mrf.mxu0
        %v547 = vadd.f32 0.0, %v546
        %v548 = vpop.f32.mrf.mxu0
        %v549 = vadd.f32 0.0, %v548
        %550 = vmatmul.bf16.gmra.mxu0 %v470
        %v551 = vpop.f32.mrf.mxu0
        %v552 = vadd.f32 0.0, %v551
        %v553 = vpop.f32.mrf.mxu0
        %v554 = vadd.f32 0.0, %v553
        %555 = vmatmul.bf16.gmra.mxu0 %v471
        %v556 = vpop.f32.mrf.mxu0
        %v557 = vadd.f32 0.0, %v556
        %v558 = vpop.f32.mrf.mxu0
        %v559 = vadd.f32 0.0, %v558
        %560 = vmatmul.bf16.gmra.mxu0 %v472
        %v561 = vpop.f32.mrf.mxu0
        %v562 = vadd.f32 0.0, %v561
        %v563 = vpop.f32.mrf.mxu0
        %v564 = vadd.f32 0.0, %v563
        %565 = vmatmul.bf16.gmra.mxu0 %v473
        %v566 = vpop.f32.mrf.mxu0
        %v567 = vadd.f32 0.0, %v566
        %v568 = vpop.f32.mrf.mxu0
        %v569 = vadd.f32 0.0, %v568
        %570 = vmatmul.bf16.gmra.mxu0 %v474
        %v571 = vpop.f32.mrf.mxu0
        %v572 = vadd.f32 0.0, %v571
        %v573 = vpop.f32.mrf.mxu0
        %v574 = vadd.f32 0.0, %v573
        %575 = vmatmul.bf16.gmra.mxu0 %v475
        %v576 = vpop.f32.mrf.mxu0
        %v577 = vadd.f32 0.0, %v576
        %v578 = vpop.f32.mrf.mxu0
        %v579 = vadd.f32 0.0, %v578
        %580 = vdwg.mxu0
        %v581 = vld [vmem:[%s305] sm:$0x1]
        %v583 = vperm.slane %v581, 0
        %v585 = vmul.f32 %v542, %v583
        %v586 = vmul.f32 %v544, %v583
        %v587 = vmul.f32 %v547, %v583
        %v588 = vmul.f32 %v549, %v583
        %v589 = vmul.f32 %v552, %v583
        %v590 = vmul.f32 %v554, %v583
        %v591 = vmul.f32 %v557, %v583
        %v592 = vmul.f32 %v559, %v583
        %v593 = vmul.f32 %v562, %v583
        %v594 = vmul.f32 %v564, %v583
        %v595 = vmul.f32 %v567, %v583
        %v596 = vmul.f32 %v569, %v583
        %v597 = vmul.f32 %v572, %v583
        %v598 = vmul.f32 %v574, %v583
        %v599 = vmul.f32 %v577, %v583
        %v600 = vmul.f32 %v579, %v583
        %v601 = vld [vmem:[%s314] sm:$0x1]
        %v603 = vperm.slane %v601, 0
        %v605 = vadd.f32 %v585, %v603
        %v606 = vadd.f32 %v586, %v603
        %v607 = vadd.f32 %v587, %v603
        %v608 = vadd.f32 %v588, %v603
        %v609 = vadd.f32 %v589, %v603
        %v610 = vadd.f32 %v590, %v603
        %v611 = vadd.f32 %v591, %v603
        %v612 = vadd.f32 %v592, %v603
        %v613 = vadd.f32 %v593, %v603
        %v614 = vadd.f32 %v594, %v603
        %v615 = vadd.f32 %v595, %v603
        %v616 = vadd.f32 %v596, %v603
        %v617 = vadd.f32 %v597, %v603
        %v618 = vadd.f32 %v598, %v603
        %v619 = vadd.f32 %v599, %v603
        %v620 = vadd.f32 %v600, %v603
        %621 = vst [vmem:[#allocation11] sm:$0xff] %v605
        %622 = vst [vmem:[#allocation11 + $0x8] sm:$0xff] %v606
        %623 = vst [vmem:[#allocation11 + $0x10] sm:$0xff] %v607
        %624 = vst [vmem:[#allocation11 + $0x18] sm:$0xff] %v608
        %625 = vst [vmem:[#allocation11 + $0x20] sm:$0xff] %v609
        %626 = vst [vmem:[#allocation11 + $0x28] sm:$0xff] %v610
        %627 = vst [vmem:[#allocation11 + $0x30] sm:$0xff] %v611
        %628 = vst [vmem:[#allocation11 + $0x38] sm:$0xff] %v612
        %629 = vst [vmem:[#allocation11 + $0x40] sm:$0xff] %v613
        %630 = vst [vmem:[#allocation11 + $0x48] sm:$0xff] %v614
        %631 = vst [vmem:[#allocation11 + $0x50] sm:$0xff] %v615
        %632 = vst [vmem:[#allocation11 + $0x58] sm:$0xff] %v616
        %633 = vst [vmem:[#allocation11 + $0x60] sm:$0xff] %v617
        %634 = vst [vmem:[#allocation11 + $0x68] sm:$0xff] %v618
        %635 = vst [vmem:[#allocation11 + $0x70] sm:$0xff] %v619
        %636 = vst [vmem:[#allocation11 + $0x78] sm:$0xff] %v620
        %p637 = scmp.lt.s32.totalorder %s23, 6
        // Predicated region
        $region65: #{tpu_custom_call.1} parent=39 // pred_check
          %p638 = pneg %p637
        $region66: #{tpu_custom_call.1} parent=39 // pred_check_branch
          %640 = sbr.rel (%p638) target = $region68
        $region67: #{tpu_custom_call.1} parent=39 // pred_region
          %v641 = vmax.f32 %v605, 0.0
          %v642 = vmax.f32 %v606, 0.0
          %v643 = vmax.f32 %v607, 0.0
          %v644 = vmax.f32 %v608, 0.0
          %v645 = vmax.f32 %v609, 0.0
          %v646 = vmax.f32 %v610, 0.0
          %v647 = vmax.f32 %v611, 0.0
          %v648 = vmax.f32 %v612, 0.0
          %v649 = vmax.f32 %v613, 0.0
          %v650 = vmax.f32 %v614, 0.0
          %v651 = vmax.f32 %v615, 0.0
          %v652 = vmax.f32 %v616, 0.0
          %v653 = vmax.f32 %v617, 0.0
          %v654 = vmax.f32 %v618, 0.0
          %v655 = vmax.f32 %v619, 0.0
          %v656 = vmax.f32 %v620, 0.0
          %v657 = vpack.c.bf16 %v642, %v641
          %v658 = vpack.c.bf16 %v644, %v643
          %v659 = vpack.c.bf16 %v646, %v645
          %v660 = vpack.c.bf16 %v648, %v647
          %v661 = vpack.c.bf16 %v650, %v649
          %v662 = vpack.c.bf16 %v652, %v651
          %v663 = vpack.c.bf16 %v654, %v653
          %v664 = vpack.c.bf16 %v656, %v655
          %v665 = vld [vmem:[%s296] sm:$0xf]
          %v666 = vld [vmem:[%s296 + $0x4] sm:$0xf]
          %v667 = vld [vmem:[%s296 + $0x8] sm:$0xf]
          %v668 = vld [vmem:[%s296 + $0xc] sm:$0xf]
          %v669 = vld [vmem:[%s296 + $0x10] sm:$0xf]
          %v670 = vld [vmem:[%s296 + $0x14] sm:$0xf]
          %v671 = vld [vmem:[%s296 + $0x18] sm:$0xf]
          %v672 = vld [vmem:[%s296 + $0x1c] sm:$0xf]
          %v673 = vld [vmem:[%s296 + $0x20] sm:$0xf]
          %v674 = vld [vmem:[%s296 + $0x24] sm:$0xf]
          %v675 = vld [vmem:[%s296 + $0x28] sm:$0xf]
          %v676 = vld [vmem:[%s296 + $0x2c] sm:$0xf]
          %v677 = vld [vmem:[%s296 + $0x30] sm:$0xf]
          %v678 = vld [vmem:[%s296 + $0x34] sm:$0xf]
          %v679 = vld [vmem:[%s296 + $0x38] sm:$0xf]
          %v680 = vld [vmem:[%s296 + $0x3c] sm:$0xf]
          %v697 = vunpack.c.l.b16 %v665
          %v698 = vunpack.c.l.b16 %v666
          %v699 = vunpack.c.l.b16 %v667
          %v700 = vunpack.c.l.b16 %v668
          %v701 = vunpack.c.l.b16 %v669
          %v702 = vunpack.c.l.b16 %v670
          %v703 = vunpack.c.l.b16 %v671
          %v704 = vunpack.c.l.b16 %v672
          %v705 = vunpack.c.l.b16 %v673
          %v706 = vunpack.c.l.b16 %v674
          %v707 = vunpack.c.l.b16 %v675
          %v708 = vunpack.c.l.b16 %v676
          %v709 = vunpack.c.l.b16 %v677
          %v710 = vunpack.c.l.b16 %v678
          %v711 = vunpack.c.l.b16 %v679
          %v712 = vunpack.c.l.b16 %v680
          %v713 = vpack.c.b16 %v698, %v697
          %v714 = vpack.c.b16 %v700, %v699
          %v715 = vpack.c.b16 %v702, %v701
          %v716 = vpack.c.b16 %v704, %v703
          %v717 = vpack.c.b16 %v706, %v705
          %v718 = vpack.c.b16 %v708, %v707
          %v719 = vpack.c.b16 %v710, %v709
          %v720 = vpack.c.b16 %v712, %v711
          %729 = vmatpush.bf16.msra.mxu0 %v720
          %730 = vmatpush.bf16.msra.mxu0 %v719
          %731 = vmatpush.bf16.msra.mxu0 %v718
          %732 = vmatpush.bf16.msra.mxu0 %v717
          %733 = vmatpush.bf16.msra.mxu0 %v716
          %734 = vmatpush.bf16.msra.mxu0 %v715
          %735 = vmatpush.bf16.msra.mxu0 %v714
          %736 = vmatpush.bf16.msra.mxu0 %v713
          %737 = vmatmul.bf16.gmra.mxu0 %v657
          %v738 = vpop.f32.mrf.mxu0
          %v739 = vadd.f32 0.0, %v738
          %v740 = vpop.f32.mrf.mxu0
          %v741 = vadd.f32 0.0, %v740
          %742 = vmatmul.bf16.gmra.mxu0 %v658
          %v743 = vpop.f32.mrf.mxu0
          %v744 = vadd.f32 0.0, %v743
          %v745 = vpop.f32.mrf.mxu0
          %v746 = vadd.f32 0.0, %v745
          %747 = vmatmul.bf16.gmra.mxu0 %v659
          %v748 = vpop.f32.mrf.mxu0
          %v749 = vadd.f32 0.0, %v748
          %v750 = vpop.f32.mrf.mxu0
          %v751 = vadd.f32 0.0, %v750
          %752 = vmatmul.bf16.gmra.mxu0 %v660
          %v753 = vpop.f32.mrf.mxu0
          %v754 = vadd.f32 0.0, %v753
          %v755 = vpop.f32.mrf.mxu0
          %v756 = vadd.f32 0.0, %v755
          %757 = vmatmul.bf16.gmra.mxu0 %v661
          %v758 = vpop.f32.mrf.mxu0
          %v759 = vadd.f32 0.0, %v758
          %v760 = vpop.f32.mrf.mxu0
          %v761 = vadd.f32 0.0, %v760
          %762 = vmatmul.bf16.gmra.mxu0 %v662
          %v763 = vpop.f32.mrf.mxu0
          %v764 = vadd.f32 0.0, %v763
          %v765 = vpop.f32.mrf.mxu0
          %v766 = vadd.f32 0.0, %v765
          %767 = vmatmul.bf16.gmra.mxu0 %v663
          %v768 = vpop.f32.mrf.mxu0
          %v769 = vadd.f32 0.0, %v768
          %v770 = vpop.f32.mrf.mxu0
          %v771 = vadd.f32 0.0, %v770
          %772 = vmatmul.bf16.gmra.mxu0 %v664
          %v773 = vpop.f32.mrf.mxu0
          %v774 = vadd.f32 0.0, %v773
          %v775 = vpop.f32.mrf.mxu0
          %v776 = vadd.f32 0.0, %v775
          %777 = vdwg.mxu0
          %v778 = vpack.c.bf16 %v739, %v739
          %v779 = vpack.c.bf16 %v741, %v741
          %v780 = vpack.c.bf16 %v744, %v744
          %v781 = vpack.c.bf16 %v746, %v746
          %v782 = vpack.c.bf16 %v749, %v749
          %v783 = vpack.c.bf16 %v751, %v751
          %v784 = vpack.c.bf16 %v754, %v754
          %v785 = vpack.c.bf16 %v756, %v756
          %v786 = vpack.c.bf16 %v759, %v759
          %v787 = vpack.c.bf16 %v761, %v761
          %v788 = vpack.c.bf16 %v764, %v764
          %v789 = vpack.c.bf16 %v766, %v766
          %v790 = vpack.c.bf16 %v769, %v769
          %v791 = vpack.c.bf16 %v771, %v771
          %v792 = vpack.c.bf16 %v774, %v774
          %v793 = vpack.c.bf16 %v776, %v776
          %s794 = sadd.s32 %s23, 1
          %p795 = scmp.lt.s32.totalorder %s794, 0
          %s796 = ssub.s32 0, %s794
          %s797 = scalar_select %p795, %s796, %s794
          %s798 = sand.u32 %s797, 1
          %s799 = ssub.s32 0, %s798
          %s800 = scalar_select %p795, %s799, %s798
          %p801 = scmp.ne.s32.totalorder %s800, 0
          %p802 = scmp.lt.s32.totalorder %s800, 0
          %p803 = pnand %p802, %p801
          %p804 = pneg %p803
          %s805 = sadd.s32 %s800, 2
          %s806 = scalar_select %p804, %s805, %s800
          %s807 = smul.u32 %s806, 16
          %s808 = sadd.s32 %s385, %s807
          %s809 = smul.addr %s808, 4
          %s810 = scalar_lea.vmem [#allocation2], %s809
          %811 = vst [vmem:[%s810] sm:$0xf] %v778
          %812 = vst [vmem:[%s810 + $0x4] sm:$0xf] %v779
          %813 = vst [vmem:[%s810 + $0x8] sm:$0xf] %v780
          %814 = vst [vmem:[%s810 + $0xc] sm:$0xf] %v781
          %815 = vst [vmem:[%s810 + $0x10] sm:$0xf] %v782
          %816 = vst [vmem:[%s810 + $0x14] sm:$0xf] %v783
          %817 = vst [vmem:[%s810 + $0x18] sm:$0xf] %v784
          %818 = vst [vmem:[%s810 + $0x1c] sm:$0xf] %v785
          %819 = vst [vmem:[%s810 + $0x20] sm:$0xf] %v786
          %820 = vst [vmem:[%s810 + $0x24] sm:$0xf] %v787
          %821 = vst [vmem:[%s810 + $0x28] sm:$0xf] %v788
          %822 = vst [vmem:[%s810 + $0x2c] sm:$0xf] %v789
          %823 = vst [vmem:[%s810 + $0x30] sm:$0xf] %v790
          %824 = vst [vmem:[%s810 + $0x34] sm:$0xf] %v791
          %825 = vst [vmem:[%s810 + $0x38] sm:$0xf] %v792
          %826 = vst [vmem:[%s810 + $0x3c] sm:$0xf] %v793
        $region68: #{tpu_custom_call.1} parent=39 // pred_fallthru
          _
        // Predicated region
        $region69: #{tpu_custom_call.1} parent=39 // pred_check
          %p827 = pneg %p169
        $region70: #{tpu_custom_call.1} parent=39 // pred_check_branch
          %829 = sbr.rel (%p827) target = $region72
        $region71: #{tpu_custom_call.1} parent=39 // pred_region
          %s830 = smul.u32 16, %s24
          %832 = vsyncadd [#allocation5], 0
          %s833 = smul.addr %s830, 8
          %s834 = scalar_lea.hbm %s5, %s833
          %s835 = sshll.u32 [#allocation11], 4
          %s836 = int_to_ptr.vmem [resolvable:$true] %s835
          %s837 = sshll.u32 %s834, 4
          %s838 = int_to_ptr.hbm [resolvable:$true] %s837
          %843 = dma.vmem_to_hbm [thread:$0]  %s836, 2048, %s838, [#allocation5], 128, 128, 8
        $region72: #{tpu_custom_call.1} parent=39 // pred_fallthru
          _
        // Predicated region
        $region73: #{tpu_custom_call.1} parent=39 // pred_check
          %p844 = pneg %p169
        $region74: #{tpu_custom_call.1} parent=39 // pred_check_branch
          %846 = sbr.rel (%p844) target = $region76
        $region75: #{tpu_custom_call.1} parent=39 // pred_region
          %848 = dma.done [#allocation5], 2048
        $region76: #{tpu_custom_call.1} parent=39 // pred_fallthru
          _
      $region40: #{tpu_custom_call.1} parent=5 // pred_fallthru
        _
      %p849 = scmp.le.s32.totalorder 2, %s14
      // Predicated region
      $region77: #{tpu_custom_call.1} parent=5 // pred_check
        %p850 = pneg %p849
      $region78: #{tpu_custom_call.1} parent=5 // pred_check_branch
        %852 = sbr.rel (%p850) target = $region80
      $region79: #{tpu_custom_call.1} parent=5 // pred_region
        %s853 = ssub.s32 %s14, 2
      $region80: #{tpu_custom_call.1} parent=5 // pred_fallthru
        _
    $region6: #{tpu_custom_call.1} parent=1 // loop_footer
      %s18 = sadd.s32 1, %s14
    $region7: #{tpu_custom_call.1} parent=1 // loop_footer_branch
      %13 = sbr.rel target = $region3
    $region8: #{tpu_custom_call.1} parent=1 // loop_exit
      _
    %854 = vsyncpa [#allocation4], 1
    %s855 = scalar_lea.sflag [#allocation4], 1
    %856 = vsyncpa %s855, 1
    %857 = vsyncpa [#allocation7], 1
    %858 = vsyncpa [#allocation5], 1
    %s859 = scalar_lea.sflag [#allocation5], 1
    %860 = vsyncpa %s859, 1

</llo_original>
